<compile_context>
chip_gen: v5e
topology: v5e:2x2
jax: 0.10.0
libtpu: 0.0.40
codegen_flags: <defaults>
</compile_context>

<pallas_src>
import functools

import jax
import jax.numpy as jnp
from jax import lax
from jax.experimental import pallas as pl
from jax.experimental.pallas import tpu as pltpu

TILE = 512          # batch rows per grid step (lane axis), multiple of 128
NEG_SLOPE = 0.01    # F.leaky_relu default


def _leaky_relu(x, slope=NEG_SLOPE):
    return jnp.where(x > 0, x, slope * x)


def revnet2_kernel(s_ref, wbig_ref, bbig_ref, wf01_ref, b01_ref, scal_ref,
                   out_ref):
    # s_ref:    (64, TILE)   activations, features on sublanes, batch on lanes
    # wbig_ref: (136, 64)    rows 0:64 = W1, 64:128 = W2, 128:130 = Wfc2, rest 0
    # bbig_ref: (136, 1)     matching biases (f32)
    # wf01_ref: (8, 128)     block-diag [wf0 0; 0 wf1], rest 0
    # b01_ref:  (8, 1)       [bf0; bf1; 0...]            (f32)
    # scal_ref: (8,) SMEM    [ws0..ws5, bs, 0]           (f32)
    # out_ref:  (1, TILE)
    s = s_ref[...]
    s_f32 = s.astype(jnp.float32)

    # Fused matmul #1: [W1; W2; Wfc2] @ s  ->  h1 | h2 | score2 in one MXU pass
    # (leaky_relu is applied to all three in the original network).
    h = jnp.dot(wbig_ref[...], s, preferred_element_type=jnp.float32)
    h = _leaky_relu(h + bbig_ref[...])                       # (136, TILE) f32

    # SH = [s * h1 ; s * h2]  (VPU elementwise, f32)
    sh = jnp.concatenate([s_f32 * h[0:64, :], s_f32 * h[64:128, :]], axis=0)

    # Fused matmul #2: block-diag(wf0, wf1) @ SH -> (score0 | score1)
    s01 = jnp.dot(wf01_ref[...], sh.astype(wf01_ref.dtype),
                  preferred_element_type=jnp.float32)
    s01 = _leaky_relu(s01 + b01_ref[...])                    # (8, TILE), rows 0..3 valid

    # cat((score0, score1, score2)) @ Ws + bs  as VPU multiply-adds.
    z = (scal_ref[0] * s01[0:1, :]
         + scal_ref[1] * s01[1:2, :]
         + scal_ref[2] * s01[2:3, :]
         + scal_ref[3] * s01[3:4, :]
         + scal_ref[4] * h[128:129, :]
         + scal_ref[5] * h[129:130, :]
         + scal_ref[6])
    out_ref[...] = jnp.tanh(z)                               # (1, TILE) lane-dense


def _pack_params(p, compute_dtype):
    """Pack PyTorch-orientation params into the fused kernel operands."""
    wbig = jnp.zeros((136, 64), jnp.float32)
    wbig = wbig.at[0:64, :].set(p["w1"])
    wbig = wbig.at[64:128, :].set(p["w2"])
    wbig = wbig.at[128:130, :].set(p["wf2"])
    bbig = jnp.zeros((136, 1), jnp.float32)
    bbig = bbig.at[0:64, 0].set(p["b1"])
    bbig = bbig.at[64:128, 0].set(p["b2"])
    bbig = bbig.at[128:130, 0].set(p["bf2"])

    wf01 = jnp.zeros((8, 128), jnp.float32)
    wf01 = wf01.at[0:2, 0:64].set(p["wf0"])
    wf01 = wf01.at[2:4, 64:128].set(p["wf1"])
    b01 = jnp.zeros((8, 1), jnp.float32)
    b01 = b01.at[0:2, 0].set(p["bf0"])
    b01 = b01.at[2:4, 0].set(p["bf1"])

    scal = jnp.concatenate(
        [p["ws"].reshape(6), p["bs"].reshape(1), jnp.zeros((1,), jnp.float32)]
    ).astype(jnp.float32)

    return (wbig.astype(compute_dtype), bbig,
            wf01.astype(compute_dtype), b01, scal)


@functools.partial(jax.jit, static_argnames=("use_bf16",))
def revnet2_forward(x, params, use_bf16=False):
    """x: any shape with total size divisible by 64 -> (N, 1) f32."""
    s = x.reshape(-1, 64).astype(jnp.float32)
    n = s.shape[0]
    n_pad = pl.cdiv(n, TILE) * TILE

    compute_dtype = jnp.bfloat16 if use_bf16 else jnp.float32
    # Transposed + zero-padded activation slab: batch on the lane axis.
    s_t = jnp.zeros((64, n_pad), jnp.float32).at[:, :n].set(s.T)
    s_t = s_t.astype(compute_dtype)

    wbig, bbig, wf01, b01, scal = _pack_params(params, compute_dtype)

    out_t = pl.pallas_call(
        revnet2_kernel,
        out_shape=jax.ShapeDtypeStruct((1, n_pad), jnp.float32),
        grid=(n_pad // TILE,),
        in_specs=[
            pl.BlockSpec((64, TILE), lambda i: (0, i)),      # activations
            pl.BlockSpec((136, 64), lambda i: (0, 0)),       # fused W1/W2/Wfc2
            pl.BlockSpec((136, 1), lambda i: (0, 0)),
            pl.BlockSpec((8, 128), lambda i: (0, 0)),        # block-diag fc0/fc1
            pl.BlockSpec((8, 1), lambda i: (0, 0)),
            pl.BlockSpec(memory_space=pltpu.MemorySpace.SMEM),  # score scalars
        ],
        out_specs=pl.BlockSpec((1, TILE), lambda i: (0, i)),
        compiler_params=pltpu.CompilerParams(
            dimension_semantics=("parallel",),
            vmem_limit_bytes=32 * 1024 * 1024,
        ),
    )(s_t, wbig, bbig, wf01, b01, scal)

    return out_t[0, :n].reshape(n, 1)


# ----------------------------- reference & init -----------------------------

def _mm(a, b):
    return jnp.dot(a, b, precision=lax.Precision.HIGHEST)


def reference_forward(x, p):
    """Pure-jnp reference mirroring the PyTorch forward (PyTorch weight layout)."""
    s = x.reshape(-1, 64).astype(jnp.float32)
    h1 = _leaky_relu(_mm(s, p["w1"].T) + p["b1"])
    h2 = _leaky_relu(_mm(s, p["w2"].T) + p["b2"])
    s0 = _leaky_relu(_mm(s * h1, p["wf0"].T) + p["bf0"])
    s1 = _leaky_relu(_mm(s * h2, p["wf1"].T) + p["bf1"])
    s2 = _leaky_relu(_mm(s, p["wf2"].T) + p["bf2"])
    cat = jnp.concatenate([s0, s1, s2], axis=1)               # (N, 6)
    return jnp.tanh(_mm(cat, p["ws"].T) + p["bs"])


def _torch_linear_init(key, out_features, in_features):
    """PyTorch nn.Linear default init; weight kept in (out, in) orientation."""
    k = 1.0 / jnp.sqrt(jnp.float32(in_features))
    kw, kb = jax.random.split(key)
    w = jax.random.uniform(kw, (out_features, in_features), jnp.float32, -k, k)
    b = jax.random.uniform(kb, (out_features,), jnp.float32, -k, k)
    return w, b


def init_params(key):
    keys = jax.random.split(key, 6)
    w1, b1 = _torch_linear_init(keys[0], 64, 64)    # self.weight1
    w2, b2 = _torch_linear_init(keys[1], 64, 64)    # self.weight2
    wf0, bf0 = _torch_linear_init(keys[2], 2, 64)   # self.fc0
    wf1, bf1 = _torch_linear_init(keys[3], 2, 64)   # self.fc1
    wf2, bf2 = _torch_linear_init(keys[4], 2, 64)   # self.fc2
    ws, bs = _torch_linear_init(keys[5], 1, 6)      # self.score
    return dict(
        w1=w1, b1=b1, w2=w2, b2=b2,
        wf0=wf0, bf0=bf0, wf1=wf1, bf1=bf1, wf2=wf2, bf2=bf2,
        ws=ws, bs=bs,
    )


if __name__ == "__main__":
    key = jax.random.PRNGKey(0)
    k_param, k_x1, k_x2 = jax.random.split(key, 3)
    params = init_params(k_param)

    # Board-like input: (2, 8, 8) -> view(-1, 64) gives (2, 64).
    x1 = jax.random.normal(k_x1, (2, 8, 8), dtype=jnp.float32)
    out1 = jax.block_until_ready(revnet2_forward(x1, params))
    ref1 = reference_forward(x1, params)
    assert out1.shape == (2, 1)
    assert jnp.allclose(out1, ref1, atol=1e-4, rtol=1e-4), "f32 small-batch mismatch"

    # Larger batch exercising the tiled grid (3 tiles of 512 with tail padding).
    x2 = jax.random.normal(k_x2, (1300, 64), dtype=jnp.float32)
    out2 = jax.block_until_ready(revnet2_forward(x2, params))
    ref2 = reference_forward(x2, params)
    assert out2.shape == (1300, 1)
    assert jnp.allclose(out2, ref2, atol=1e-4, rtol=1e-4), "f32 large-batch mismatch"

    # bf16 matmul-operand path (halves HBM traffic on v6e/v7x); looser tolerance.
    out3 = jax.block_until_ready(revnet2_forward(x2, params, use_bf16=True))
    assert out3.shape == (1300, 1)
    assert jnp.allclose(out3, ref2, atol=5e-2, rtol=5e-2), "bf16 path mismatch"

    print("KERNEL_OK")
</pallas_src>

<mosaic_0001>
module attributes {stable_mosaic.version = 11 : i64} {
  func.func @revnet2_kernel(%arg0: i32, %arg1: memref<64x512xf32, #tpu.memory_space<vmem>>, %arg2: memref<136x64xf32, #tpu.memory_space<vmem>>, %arg3: memref<136x1xf32, #tpu.memory_space<vmem>>, %arg4: memref<8x128xf32, #tpu.memory_space<vmem>>, %arg5: memref<8x1xf32, #tpu.memory_space<vmem>>, %arg6: memref<8xf32, #tpu.memory_space<smem>>, %arg7: memref<1x512xf32, #tpu.memory_space<vmem>>) attributes {dimension_semantics = [#tpu.dimension_semantics<parallel>], iteration_bounds = array<i64: 1>, scalar_prefetch = 0 : i64, scratch_operands = 0 : i64, tpu.core_type = #tpu.core_type<tc>, window_params = [{transform_indices = @transform_0, window_bounds = array<i64: 64, 512>}, {pipeline_mode = #tpu.pipeline_mode<synchronous>, transform_indices = @transform_1, window_bounds = array<i64: 136, 64>}, {pipeline_mode = #tpu.pipeline_mode<synchronous>, transform_indices = @transform_2, window_bounds = array<i64: 136, 1>}, {pipeline_mode = #tpu.pipeline_mode<synchronous>, transform_indices = @transform_3, window_bounds = array<i64: 8, 128>}, {pipeline_mode = #tpu.pipeline_mode<synchronous>, transform_indices = @transform_4, window_bounds = array<i64: 8, 1>}, {transform_indices = @transform_5, window_bounds = array<i64: 8>}, {transform_indices = @transform_6, window_bounds = array<i64: 1, 512>}]} {
    %c0 = arith.constant 0 : index
    %c0_0 = arith.constant 0 : index
    %0 = vector.load %arg1[%c0, %c0_0] : memref<64x512xf32, #tpu.memory_space<vmem>>, vector<64x512xf32>
    %c0_1 = arith.constant 0 : index
    %c0_2 = arith.constant 0 : index
    %1 = vector.load %arg2[%c0_1, %c0_2] : memref<136x64xf32, #tpu.memory_space<vmem>>, vector<136x64xf32>
    %cst = arith.constant dense<0.000000e+00> : vector<136x512xf32>
    %2 = tpu.matmul %1, %0, %cst {dimension_numbers = #tpu.dot_dimension_numbers<[1], [0], [0], [1], [0, 0, 1, 1], [], []>} : vector<136x64xf32>, vector<64x512xf32>, vector<136x512xf32> -> vector<136x512xf32>
    %c0_3 = arith.constant 0 : index
    %c0_4 = arith.constant 0 : index
    %3 = vector.load %arg3[%c0_3, %c0_4] : memref<136x1xf32, #tpu.memory_space<vmem>>, vector<136x1xf32>
    %4 = vector.broadcast %3 : vector<136x1xf32> to vector<136x512xf32>
    %5 = arith.addf %2, %4 : vector<136x512xf32>
    %cst_5 = arith.constant 0.000000e+00 : f32
    %6 = vector.broadcast %cst_5 : f32 to vector<136x512xf32>
    %7 = arith.cmpf ogt, %5, %6 : vector<136x512xf32>
    %cst_6 = arith.constant 0.00999999977 : f32
    %8 = vector.broadcast %cst_6 : f32 to vector<136x512xf32>
    %9 = arith.mulf %8, %5 : vector<136x512xf32>
    %10 = arith.select %7, %5, %9 : vector<136x512xi1>, vector<136x512xf32>
    %11 = vector.extract_strided_slice %10 {offsets = [0, 0], sizes = [64, 512], strides = [1, 1]} : vector<136x512xf32> to vector<64x512xf32>
    %12 = arith.mulf %0, %11 : vector<64x512xf32>
    %13 = vector.extract_strided_slice %10 {offsets = [64, 0], sizes = [64, 512], strides = [1, 1]} : vector<136x512xf32> to vector<64x512xf32>
    %14 = arith.mulf %0, %13 : vector<64x512xf32>
    %15 = tpu.concatenate %12, %14 in 0 : vector<64x512xf32>, vector<64x512xf32> -> vector<128x512xf32>
    %c0_7 = arith.constant 0 : index
    %c0_8 = arith.constant 0 : index
    %16 = vector.load %arg4[%c0_7, %c0_8] : memref<8x128xf32, #tpu.memory_space<vmem>>, vector<8x128xf32>
    %cst_9 = arith.constant dense<0.000000e+00> : vector<8x512xf32>
    %17 = tpu.matmul %16, %15, %cst_9 {dimension_numbers = #tpu.dot_dimension_numbers<[1], [0], [0], [1], [0, 0, 1, 1], [], []>} : vector<8x128xf32>, vector<128x512xf32>, vector<8x512xf32> -> vector<8x512xf32>
    %c0_10 = arith.constant 0 : index
    %c0_11 = arith.constant 0 : index
    %18 = vector.load %arg5[%c0_10, %c0_11] : memref<8x1xf32, #tpu.memory_space<vmem>>, vector<8x1xf32>
    %19 = vector.broadcast %18 : vector<8x1xf32> to vector<8x512xf32>
    %20 = arith.addf %17, %19 : vector<8x512xf32>
    %cst_12 = arith.constant 0.000000e+00 : f32
    %21 = vector.broadcast %cst_12 : f32 to vector<8x512xf32>
    %22 = arith.cmpf ogt, %20, %21 : vector<8x512xf32>
    %cst_13 = arith.constant 0.00999999977 : f32
    %23 = vector.broadcast %cst_13 : f32 to vector<8x512xf32>
    %24 = arith.mulf %23, %20 : vector<8x512xf32>
    %25 = arith.select %22, %20, %24 : vector<8x512xi1>, vector<8x512xf32>
    %c0_14 = arith.constant 0 : index
    %26 = memref.load %arg6[%c0_14] : memref<8xf32, #tpu.memory_space<smem>>
    %27 = vector.extract_strided_slice %25 {offsets = [0, 0], sizes = [1, 512], strides = [1, 1]} : vector<8x512xf32> to vector<1x512xf32>
    %28 = vector.broadcast %26 : f32 to vector<1x512xf32>
    %29 = arith.mulf %28, %27 : vector<1x512xf32>
    %c1 = arith.constant 1 : index
    %30 = memref.load %arg6[%c1] : memref<8xf32, #tpu.memory_space<smem>>
    %31 = vector.extract_strided_slice %25 {offsets = [1, 0], sizes = [1, 512], strides = [1, 1]} : vector<8x512xf32> to vector<1x512xf32>
    %32 = vector.broadcast %30 : f32 to vector<1x512xf32>
    %33 = arith.mulf %32, %31 : vector<1x512xf32>
    %34 = arith.addf %29, %33 : vector<1x512xf32>
    %c2 = arith.constant 2 : index
    %35 = memref.load %arg6[%c2] : memref<8xf32, #tpu.memory_space<smem>>
    %36 = vector.extract_strided_slice %25 {offsets = [2, 0], sizes = [1, 512], strides = [1, 1]} : vector<8x512xf32> to vector<1x512xf32>
    %37 = vector.broadcast %35 : f32 to vector<1x512xf32>
    %38 = arith.mulf %37, %36 : vector<1x512xf32>
    %39 = arith.addf %34, %38 : vector<1x512xf32>
    %c3 = arith.constant 3 : index
    %40 = memref.load %arg6[%c3] : memref<8xf32, #tpu.memory_space<smem>>
    %41 = vector.extract_strided_slice %25 {offsets = [3, 0], sizes = [1, 512], strides = [1, 1]} : vector<8x512xf32> to vector<1x512xf32>
    %42 = vector.broadcast %40 : f32 to vector<1x512xf32>
    %43 = arith.mulf %42, %41 : vector<1x512xf32>
    %44 = arith.addf %39, %43 : vector<1x512xf32>
    %c4 = arith.constant 4 : index
    %45 = memref.load %arg6[%c4] : memref<8xf32, #tpu.memory_space<smem>>
    %46 = vector.extract_strided_slice %10 {offsets = [128, 0], sizes = [1, 512], strides = [1, 1]} : vector<136x512xf32> to vector<1x512xf32>
    %47 = vector.broadcast %45 : f32 to vector<1x512xf32>
    %48 = arith.mulf %47, %46 : vector<1x512xf32>
    %49 = arith.addf %44, %48 : vector<1x512xf32>
    %c5 = arith.constant 5 : index
    %50 = memref.load %arg6[%c5] : memref<8xf32, #tpu.memory_space<smem>>
    %51 = vector.extract_strided_slice %10 {offsets = [129, 0], sizes = [1, 512], strides = [1, 1]} : vector<136x512xf32> to vector<1x512xf32>
    %52 = vector.broadcast %50 : f32 to vector<1x512xf32>
    %53 = arith.mulf %52, %51 : vector<1x512xf32>
    %54 = arith.addf %49, %53 : vector<1x512xf32>
    %c6 = arith.constant 6 : index
    %55 = memref.load %arg6[%c6] : memref<8xf32, #tpu.memory_space<smem>>
    %56 = vector.broadcast %55 : f32 to vector<1x512xf32>
    %57 = arith.addf %54, %56 : vector<1x512xf32>
    %58 = math.tanh %57 : vector<1x512xf32>
    %c0_15 = arith.constant 0 : index
    %c0_16 = arith.constant 0 : index
    %59 = vector.load %arg7[%c0_15, %c0_16] : memref<1x512xf32, #tpu.memory_space<vmem>>, vector<1x512xf32>
    tpu.vector_store %arg7[%c0_15, %c0_16], %58 {strides = array<i32>} : memref<1x512xf32, #tpu.memory_space<vmem>>, vector<1x512xf32>,
    return
  }
  func.func @transform_0(%arg0: i32) -> (i32, i32) {
    %c0_i32 = arith.constant 0 : i32
    %c0_i32_0 = arith.constant 0 : i32
    return %c0_i32, %arg0 : i32, i32
  }
  func.func @transform_1(%arg0: i32) -> (i32, i32) {
    %c0_i32 = arith.constant 0 : i32
    %c0_i32_0 = arith.constant 0 : i32
    %c0_i32_1 = arith.constant 0 : i32
    return %c0_i32, %c0_i32_0 : i32, i32
  }
  func.func @transform_2(%arg0: i32) -> (i32, i32) {
    %c0_i32 = arith.constant 0 : i32
    %c0_i32_0 = arith.constant 0 : i32
    %c0_i32_1 = arith.constant 0 : i32
    return %c0_i32, %c0_i32_0 : i32, i32
  }
  func.func @transform_3(%arg0: i32) -> (i32, i32) {
    %c0_i32 = arith.constant 0 : i32
    %c0_i32_0 = arith.constant 0 : i32
    %c0_i32_1 = arith.constant 0 : i32
    return %c0_i32, %c0_i32_0 : i32, i32
  }
  func.func @transform_4(%arg0: i32) -> (i32, i32) {
    %c0_i32 = arith.constant 0 : i32
    %c0_i32_0 = arith.constant 0 : i32
    %c0_i32_1 = arith.constant 0 : i32
    return %c0_i32, %c0_i32_0 : i32, i32
  }
  func.func @transform_5(%arg0: i32) -> i32 {
    %c0_i32 = arith.constant 0 : i32
    %c0_i32_0 = arith.constant 0 : i32
    return %c0_i32 : i32
  }
  func.func @transform_6(%arg0: i32) -> (i32, i32) {
    %c0_i32 = arith.constant 0 : i32
    %c0_i32_0 = arith.constant 0 : i32
    return %c0_i32, %arg0 : i32, i32
  }
}

</mosaic_0001>

<llo_original>
// kernel: revnet2_forward.1
$region0: #{revnet2_forward.1}
  #allocation0 [shape = 'u32[]', space=smem, size = 0x4, offset = 0x4, fixed_abs, tag = 'smem constant byte address 0x4 - core index']
  #allocation1 [shape = 'u32[72,128]{1,0:T(1,128)}', space=vmem, size = 0x9000, scoped, tag = 'internal scratch']
  %s0 = inlined_call_operand.vmem [shape: f32[64,512], index: 0, kind: input, shape index: {}]
  %s1 = inlined_call_operand.vmem [shape: f32[136,64], index: 1, kind: input, shape index: {}]
  %s2 = inlined_call_operand.vmem [shape: f32[136,1], index: 2, kind: input, shape index: {}]
  %s3 = inlined_call_operand.vmem [shape: f32[8,128], index: 3, kind: input, shape index: {}]
  %s4 = inlined_call_operand.vmem [shape: f32[8,1], index: 4, kind: input, shape index: {}]
  %s5 = inlined_call_operand.vmem [shape: f32[8], index: 5, kind: input, shape index: {}]
  %s6 = inlined_call_operand.vmem [shape: f32[1,512], index: 6, kind: output, shape index: {}]
  %s7 = sld [smem:[#allocation0]]
  $region38: #{revnet2_forward.1} parent=0
    _
  %s9 = ssub.s32 1, %s7
  %s10 = scalar_select 0, %s9, %s7
  $region1: #{revnet2_forward.1} parent=0
    #allocation2 [shape = 'u8[512]{0}', space=smem, size = 0x200, scoped, tag = 'input window, operand 5, single buffered']
    #allocation3 [shape = 's32[1]{0}', space=sflag, size = 0x4, scoped, tag = 'scoped memory for revnet2_forward.1']
    %11 = vsyncpa [#allocation3], 0
    // Predicated region
    $region2: #{revnet2_forward.1} parent=1 // pred_check
      _
    $region3: #{revnet2_forward.1} parent=1 // pred_check_branch
      %13 = sbr.rel (0) target = $region5
    $region4: #{revnet2_forward.1} parent=1 // pred_region
      _
    $region5: #{revnet2_forward.1} parent=1 // pred_fallthru
      _
    // Predicated region
    $region6: #{revnet2_forward.1} parent=1 // pred_check
      _
    $region7: #{revnet2_forward.1} parent=1 // pred_check_branch
      %15 = sbr.rel (0) target = $region9
    $region8: #{revnet2_forward.1} parent=1 // pred_region
      _
    $region9: #{revnet2_forward.1} parent=1 // pred_fallthru
      _
    // Predicated region
    $region10: #{revnet2_forward.1} parent=1 // pred_check
      _
    $region11: #{revnet2_forward.1} parent=1 // pred_check_branch
      %17 = sbr.rel (0) target = $region13
    $region12: #{revnet2_forward.1} parent=1 // pred_region
      _
    $region13: #{revnet2_forward.1} parent=1 // pred_fallthru
      _
    // Predicated region
    $region14: #{revnet2_forward.1} parent=1 // pred_check
      _
    $region15: #{revnet2_forward.1} parent=1 // pred_check_branch
      %19 = sbr.rel (0) target = $region17
    $region16: #{revnet2_forward.1} parent=1 // pred_region
      _
    $region17: #{revnet2_forward.1} parent=1 // pred_fallthru
      _
    // Predicated region
    $region18: #{revnet2_forward.1} parent=1 // pred_check
      _
    $region19: #{revnet2_forward.1} parent=1 // pred_check_branch
      %21 = sbr.rel (0) target = $region21
    $region20: #{revnet2_forward.1} parent=1 // pred_region
      _
    $region21: #{revnet2_forward.1} parent=1 // pred_fallthru
      _
    // Predicated region
    $region22: #{revnet2_forward.1} parent=1 // pred_check
      _
    $region23: #{revnet2_forward.1} parent=1 // pred_check_branch
      %23 = sbr.rel (0) target = $region25
    $region24: #{revnet2_forward.1} parent=1 // pred_region
      %25 = vsyncadd [#allocation3], 0
      %s27 = sshll.u32 %s5, 4
      %s28 = int_to_ptr.vmem [resolvable:$true] %s27
      %30 = dma.vmem_to_smem %s28, 16, [#allocation2], [#allocation3]
    $region25: #{revnet2_forward.1} parent=1 // pred_fallthru
      _
    // Predicated region
    $region26: #{revnet2_forward.1} parent=1 // pred_check
      _
    $region27: #{revnet2_forward.1} parent=1 // pred_check_branch
      %32 = sbr.rel (0) target = $region29
    $region28: #{revnet2_forward.1} parent=1 // pred_region
      %34 = dma.done [#allocation3], 16
    $region29: #{revnet2_forward.1} parent=1 // pred_fallthru
      _
    %35 = sfence
    %v36 = vld [vmem:[%s0] sm:$0xff]
    %v37 = vld [vmem:[%s0 + $0x8] sm:$0xff]
    %v38 = vld [vmem:[%s0 + $0x10] sm:$0xff]
    %v39 = vld [vmem:[%s0 + $0x18] sm:$0xff]
    %v40 = vld [vmem:[%s0 + $0x20] sm:$0xff]
    %v41 = vld [vmem:[%s0 + $0x28] sm:$0xff]
    %v42 = vld [vmem:[%s0 + $0x30] sm:$0xff]
    %v43 = vld [vmem:[%s0 + $0x38] sm:$0xff]
    %v44 = vld [vmem:[%s0 + $0x40] sm:$0xff]
    %v45 = vld [vmem:[%s0 + $0x48] sm:$0xff]
    %v46 = vld [vmem:[%s0 + $0x50] sm:$0xff]
    %v47 = vld [vmem:[%s0 + $0x58] sm:$0xff]
    %v48 = vld [vmem:[%s0 + $0x60] sm:$0xff]
    %v49 = vld [vmem:[%s0 + $0x68] sm:$0xff]
    %v50 = vld [vmem:[%s0 + $0x70] sm:$0xff]
    %v51 = vld [vmem:[%s0 + $0x78] sm:$0xff]
    %v52 = vld [vmem:[%s0 + $0x80] sm:$0xff]
    %v53 = vld [vmem:[%s0 + $0x88] sm:$0xff]
    %v54 = vld [vmem:[%s0 + $0x90] sm:$0xff]
    %v55 = vld [vmem:[%s0 + $0x98] sm:$0xff]
    %v56 = vld [vmem:[%s0 + $0xa0] sm:$0xff]
    %v57 = vld [vmem:[%s0 + $0xa8] sm:$0xff]
    %v58 = vld [vmem:[%s0 + $0xb0] sm:$0xff]
    %v59 = vld [vmem:[%s0 + $0xb8] sm:$0xff]
    %v60 = vld [vmem:[%s0 + $0xc0] sm:$0xff]
    %v61 = vld [vmem:[%s0 + $0xc8] sm:$0xff]
    %v62 = vld [vmem:[%s0 + $0xd0] sm:$0xff]
    %v63 = vld [vmem:[%s0 + $0xd8] sm:$0xff]
    %v64 = vld [vmem:[%s0 + $0xe0] sm:$0xff]
    %v65 = vld [vmem:[%s0 + $0xe8] sm:$0xff]
    %v66 = vld [vmem:[%s0 + $0xf0] sm:$0xff]
    %v67 = vld [vmem:[%s0 + $0xf8] sm:$0xff]
    %v68 = vld [vmem:[%s1] sm:$0xff]
    %v69 = vld [vmem:[%s1 + $0x8] sm:$0xff]
    %v70 = vld [vmem:[%s1 + $0x10] sm:$0xff]
    %v71 = vld [vmem:[%s1 + $0x18] sm:$0xff]
    %v72 = vld [vmem:[%s1 + $0x20] sm:$0xff]
    %v73 = vld [vmem:[%s1 + $0x28] sm:$0xff]
    %v74 = vld [vmem:[%s1 + $0x30] sm:$0xff]
    %v75 = vld [vmem:[%s1 + $0x38] sm:$0xff]
    %v76 = vld [vmem:[%s1 + $0x40] sm:$0xff]
    %v77 = vld [vmem:[%s1 + $0x48] sm:$0xff]
    %v78 = vld [vmem:[%s1 + $0x50] sm:$0xff]
    %v79 = vld [vmem:[%s1 + $0x58] sm:$0xff]
    %v80 = vld [vmem:[%s1 + $0x60] sm:$0xff]
    %v81 = vld [vmem:[%s1 + $0x68] sm:$0xff]
    %v82 = vld [vmem:[%s1 + $0x70] sm:$0xff]
    %v83 = vld [vmem:[%s1 + $0x78] sm:$0xff]
    %v84 = vld [vmem:[%s1 + $0x80] sm:$0xff]
    %v85 = vld [vmem:[%s2] sm:$0xff]
    %v86 = vld [vmem:[%s2 + $0x8] sm:$0xff]
    %v87 = vld [vmem:[%s2 + $0x10] sm:$0xff]
    %v88 = vld [vmem:[%s2 + $0x18] sm:$0xff]
    %v89 = vld [vmem:[%s2 + $0x20] sm:$0xff]
    %v90 = vld [vmem:[%s2 + $0x28] sm:$0xff]
    %v91 = vld [vmem:[%s2 + $0x30] sm:$0xff]
    %v92 = vld [vmem:[%s2 + $0x38] sm:$0xff]
    %v93 = vld [vmem:[%s2 + $0x40] sm:$0xff]
    %v94 = vld [vmem:[%s2 + $0x48] sm:$0xff]
    %v95 = vld [vmem:[%s2 + $0x50] sm:$0xff]
    %v96 = vld [vmem:[%s2 + $0x58] sm:$0xff]
    %v97 = vld [vmem:[%s2 + $0x60] sm:$0xff]
    %v98 = vld [vmem:[%s2 + $0x68] sm:$0xff]
    %v99 = vld [vmem:[%s2 + $0x70] sm:$0xff]
    %v100 = vld [vmem:[%s2 + $0x78] sm:$0xff]
    %v101 = vld [vmem:[%s2 + $0x80] sm:$0xff]
    %103 = vset.pattern.permute.xlu0 0
    %104 = vperm.xlu0 %103, %v85
    %v105 = vpop.permute.xlu0 %104
    %108 = vset.pattern.permute.xlu0 0
    %109 = vperm.xlu0 %108, %v86
    %v110 = vpop.permute.xlu0 %109
    %113 = vset.pattern.permute.xlu0 0
    %114 = vperm.xlu0 %113, %v87
    %v115 = vpop.permute.xlu0 %114
    %118 = vset.pattern.permute.xlu0 0
    %119 = vperm.xlu0 %118, %v88
    %v120 = vpop.permute.xlu0 %119
    %123 = vset.pattern.permute.xlu0 0
    %124 = vperm.xlu0 %123, %v89
    %v125 = vpop.permute.xlu0 %124
    %128 = vset.pattern.permute.xlu0 0
    %129 = vperm.xlu0 %128, %v90
    %v130 = vpop.permute.xlu0 %129
    %133 = vset.pattern.permute.xlu0 0
    %134 = vperm.xlu0 %133, %v91
    %v135 = vpop.permute.xlu0 %134
    %138 = vset.pattern.permute.xlu0 0
    %139 = vperm.xlu0 %138, %v92
    %v140 = vpop.permute.xlu0 %139
    %143 = vset.pattern.permute.xlu0 0
    %144 = vperm.xlu0 %143, %v93
    %v145 = vpop.permute.xlu0 %144
    %148 = vset.pattern.permute.xlu0 0
    %149 = vperm.xlu0 %148, %v94
    %v150 = vpop.permute.xlu0 %149
    %153 = vset.pattern.permute.xlu0 0
    %154 = vperm.xlu0 %153, %v95
    %v155 = vpop.permute.xlu0 %154
    %158 = vset.pattern.permute.xlu0 0
    %159 = vperm.xlu0 %158, %v96
    %v160 = vpop.permute.xlu0 %159
    %163 = vset.pattern.permute.xlu0 0
    %164 = vperm.xlu0 %163, %v97
    %v165 = vpop.permute.xlu0 %164
    %168 = vset.pattern.permute.xlu0 0
    %169 = vperm.xlu0 %168, %v98
    %v170 = vpop.permute.xlu0 %169
    %173 = vset.pattern.permute.xlu0 0
    %174 = vperm.xlu0 %173, %v99
    %v175 = vpop.permute.xlu0 %174
    %178 = vset.pattern.permute.xlu0 0
    %179 = vperm.xlu0 %178, %v100
    %v180 = vpop.permute.xlu0 %179
    %183 = vset.pattern.permute.xlu0 0
    %184 = vperm.xlu0 %183, %v101
    %v185 = vpop.permute.xlu0 %184
    %vm187 = vcmask 523264
    %v189 = vsel %vm187, %v68, 0
    %v192 = vsel %vm187, %v69, 0
    %v195 = vsel %vm187, %v70, 0
    %v198 = vsel %vm187, %v71, 0
    %v201 = vsel %vm187, %v72, 0
    %v204 = vsel %vm187, %v73, 0
    %v207 = vsel %vm187, %v74, 0
    %v210 = vsel %vm187, %v75, 0
    %v213 = vsel %vm187, %v76, 0
    %v216 = vsel %vm187, %v77, 0
    %v219 = vsel %vm187, %v78, 0
    %v222 = vsel %vm187, %v79, 0
    %v225 = vsel %vm187, %v80, 0
    %v228 = vsel %vm187, %v81, 0
    %v231 = vsel %vm187, %v82, 0
    %v234 = vsel %vm187, %v83, 0
    %v237 = vsel %vm187, %v84, 0
    %239 = vmatpush.msra.mxu0 0.0
    %240 = vmatpush.msra.mxu0 0.0
    %241 = vmatpush.msra.mxu0 0.0
    %242 = vmatpush.msra.mxu0 0.0
    %243 = vmatpush.msra.mxu0 0.0
    %244 = vmatpush.msra.mxu0 0.0
    %245 = vmatpush.msra.mxu0 0.0
    %246 = vmatpush.msra.mxu0 0.0
    %247 = vmatpush.msra.mxu0 %v64
    %248 = vmatpush.msra.mxu0 %v60
    %249 = vmatpush.msra.mxu0 %v56
    %250 = vmatpush.msra.mxu0 %v52
    %251 = vmatpush.msra.mxu0 %v48
    %252 = vmatpush.msra.mxu0 %v44
    %253 = vmatpush.msra.mxu0 %v40
    %254 = vmatpush.msra.mxu0 %v36
    %255 = vmatmul.f32.gmra.mxu0 %v189
    %v256 = vpop.f32.mrf.mxu0
    %v257 = vadd.f32 %v105, %v256
    %258 = vmatmul.f32.gmra.mxu0 %v192
    %v259 = vpop.f32.mrf.mxu0
    %v260 = vadd.f32 %v110, %v259
    %261 = vmatmul.f32.gmra.mxu0 %v195
    %v262 = vpop.f32.mrf.mxu0
    %v263 = vadd.f32 %v115, %v262
    %264 = vmatmul.f32.gmra.mxu0 %v198
    %v265 = vpop.f32.mrf.mxu0
    %v266 = vadd.f32 %v120, %v265
    %267 = vmatmul.f32.gmra.mxu0 %v201
    %v268 = vpop.f32.mrf.mxu0
    %v269 = vadd.f32 %v125, %v268
    %270 = vmatmul.f32.gmra.mxu0 %v204
    %v271 = vpop.f32.mrf.mxu0
    %v272 = vadd.f32 %v130, %v271
    %273 = vmatmul.f32.gmra.mxu0 %v207
    %v274 = vpop.f32.mrf.mxu0
    %v275 = vadd.f32 %v135, %v274
    %276 = vmatmul.f32.gmra.mxu0 %v210
    %v277 = vpop.f32.mrf.mxu0
    %v278 = vadd.f32 %v140, %v277
    %279 = vmatmul.f32.gmra.mxu0 %v213
    %v280 = vpop.f32.mrf.mxu0
    %v281 = vadd.f32 %v145, %v280
    %282 = vmatmul.f32.gmra.mxu0 %v216
    %v283 = vpop.f32.mrf.mxu0
    %v284 = vadd.f32 %v150, %v283
    %285 = vmatmul.f32.gmra.mxu0 %v219
    %v286 = vpop.f32.mrf.mxu0
    %v287 = vadd.f32 %v155, %v286
    %288 = vmatmul.f32.gmra.mxu0 %v222
    %v289 = vpop.f32.mrf.mxu0
    %v290 = vadd.f32 %v160, %v289
    %291 = vmatmul.f32.gmra.mxu0 %v225
    %v292 = vpop.f32.mrf.mxu0
    %v293 = vadd.f32 %v165, %v292
    %294 = vmatmul.f32.gmra.mxu0 %v228
    %v295 = vpop.f32.mrf.mxu0
    %v296 = vadd.f32 %v170, %v295
    %297 = vmatmul.f32.gmra.mxu0 %v231
    %v298 = vpop.f32.mrf.mxu0
    %v299 = vadd.f32 %v175, %v298
    %300 = vmatmul.f32.gmra.mxu0 %v234
    %v301 = vpop.f32.mrf.mxu0
    %v302 = vadd.f32 %v180, %v301
    %303 = vmatmul.f32.gmra.mxu0 %v237
    %v304 = vpop.f32.mrf.mxu0
    %v305 = vadd.f32 %v185, %v304
    %306 = vdwg.mxu0
    %307 = vmatpush.msra.mxu0 0.0
    %308 = vmatpush.msra.mxu0 0.0
    %309 = vmatpush.msra.mxu0 0.0
    %310 = vmatpush.msra.mxu0 0.0
    %311 = vmatpush.msra.mxu0 0.0
    %312 = vmatpush.msra.mxu0 0.0
    %313 = vmatpush.msra.mxu0 0.0
    %314 = vmatpush.msra.mxu0 0.0
    %315 = vmatpush.msra.mxu0 %v65
    %316 = vmatpush.msra.mxu0 %v61
    %317 = vmatpush.msra.mxu0 %v57
    %318 = vmatpush.msra.mxu0 %v53
    %319 = vmatpush.msra.mxu0 %v49
    %320 = vmatpush.msra.mxu0 %v45
    %321 = vmatpush.msra.mxu0 %v41
    %322 = vmatpush.msra.mxu0 %v37
    %323 = vmatmul.f32.gmra.mxu0 %v189
    %v324 = vpop.f32.mrf.mxu0
    %v325 = vadd.f32 %v105, %v324
    %326 = vmatmul.f32.gmra.mxu0 %v192
    %v327 = vpop.f32.mrf.mxu0
    %v328 = vadd.f32 %v110, %v327
    %329 = vmatmul.f32.gmra.mxu0 %v195
    %v330 = vpop.f32.mrf.mxu0
    %v331 = vadd.f32 %v115, %v330
    %332 = vmatmul.f32.gmra.mxu0 %v198
    %v333 = vpop.f32.mrf.mxu0
    %v334 = vadd.f32 %v120, %v333
    %335 = vmatmul.f32.gmra.mxu0 %v201
    %v336 = vpop.f32.mrf.mxu0
    %v337 = vadd.f32 %v125, %v336
    %338 = vmatmul.f32.gmra.mxu0 %v204
    %v339 = vpop.f32.mrf.mxu0
    %v340 = vadd.f32 %v130, %v339
    %341 = vmatmul.f32.gmra.mxu0 %v207
    %v342 = vpop.f32.mrf.mxu0
    %v343 = vadd.f32 %v135, %v342
    %344 = vmatmul.f32.gmra.mxu0 %v210
    %v345 = vpop.f32.mrf.mxu0
    %v346 = vadd.f32 %v140, %v345
    %347 = vmatmul.f32.gmra.mxu0 %v213
    %v348 = vpop.f32.mrf.mxu0
    %v349 = vadd.f32 %v145, %v348
    %350 = vmatmul.f32.gmra.mxu0 %v216
    %v351 = vpop.f32.mrf.mxu0
    %v352 = vadd.f32 %v150, %v351
    %353 = vmatmul.f32.gmra.mxu0 %v219
    %v354 = vpop.f32.mrf.mxu0
    %v355 = vadd.f32 %v155, %v354
    %356 = vmatmul.f32.gmra.mxu0 %v222
    %v357 = vpop.f32.mrf.mxu0
    %v358 = vadd.f32 %v160, %v357
    %359 = vmatmul.f32.gmra.mxu0 %v225
    %v360 = vpop.f32.mrf.mxu0
    %v361 = vadd.f32 %v165, %v360
    %362 = vmatmul.f32.gmra.mxu0 %v228
    %v363 = vpop.f32.mrf.mxu0
    %v364 = vadd.f32 %v170, %v363
    %365 = vmatmul.f32.gmra.mxu0 %v231
    %v366 = vpop.f32.mrf.mxu0
    %v367 = vadd.f32 %v175, %v366
    %368 = vmatmul.f32.gmra.mxu0 %v234
    %v369 = vpop.f32.mrf.mxu0
    %v370 = vadd.f32 %v180, %v369
    %371 = vmatmul.f32.gmra.mxu0 %v237
    %v372 = vpop.f32.mrf.mxu0
    %v373 = vadd.f32 %v185, %v372
    %374 = vdwg.mxu0
    %375 = vmatpush.msra.mxu0 0.0
    %376 = vmatpush.msra.mxu0 0.0
    %377 = vmatpush.msra.mxu0 0.0
    %378 = vmatpush.msra.mxu0 0.0
    %379 = vmatpush.msra.mxu0 0.0
    %380 = vmatpush.msra.mxu0 0.0
    %381 = vmatpush.msra.mxu0 0.0
    %382 = vmatpush.msra.mxu0 0.0
    %383 = vmatpush.msra.mxu0 %v66
    %384 = vmatpush.msra.mxu0 %v62
    %385 = vmatpush.msra.mxu0 %v58
    %386 = vmatpush.msra.mxu0 %v54
    %387 = vmatpush.msra.mxu0 %v50
    %388 = vmatpush.msra.mxu0 %v46
    %389 = vmatpush.msra.mxu0 %v42
    %390 = vmatpush.msra.mxu0 %v38
    %391 = vmatmul.f32.gmra.mxu0 %v189
    %v392 = vpop.f32.mrf.mxu0
    %v393 = vadd.f32 %v105, %v392
    %394 = vmatmul.f32.gmra.mxu0 %v192
    %v395 = vpop.f32.mrf.mxu0
    %v396 = vadd.f32 %v110, %v395
    %397 = vmatmul.f32.gmra.mxu0 %v195
    %v398 = vpop.f32.mrf.mxu0
    %v399 = vadd.f32 %v115, %v398
    %400 = vmatmul.f32.gmra.mxu0 %v198
    %v401 = vpop.f32.mrf.mxu0
    %v402 = vadd.f32 %v120, %v401
    %403 = vmatmul.f32.gmra.mxu0 %v201
    %v404 = vpop.f32.mrf.mxu0
    %v405 = vadd.f32 %v125, %v404
    %406 = vmatmul.f32.gmra.mxu0 %v204
    %v407 = vpop.f32.mrf.mxu0
    %v408 = vadd.f32 %v130, %v407
    %409 = vmatmul.f32.gmra.mxu0 %v207
    %v410 = vpop.f32.mrf.mxu0
    %v411 = vadd.f32 %v135, %v410
    %412 = vmatmul.f32.gmra.mxu0 %v210
    %v413 = vpop.f32.mrf.mxu0
    %v414 = vadd.f32 %v140, %v413
    %415 = vmatmul.f32.gmra.mxu0 %v213
    %v416 = vpop.f32.mrf.mxu0
    %v417 = vadd.f32 %v145, %v416
    %418 = vmatmul.f32.gmra.mxu0 %v216
    %v419 = vpop.f32.mrf.mxu0
    %v420 = vadd.f32 %v150, %v419
    %421 = vmatmul.f32.gmra.mxu0 %v219
    %v422 = vpop.f32.mrf.mxu0
    %v423 = vadd.f32 %v155, %v422
    %424 = vmatmul.f32.gmra.mxu0 %v222
    %v425 = vpop.f32.mrf.mxu0
    %v426 = vadd.f32 %v160, %v425
    %427 = vmatmul.f32.gmra.mxu0 %v225
    %v428 = vpop.f32.mrf.mxu0
    %v429 = vadd.f32 %v165, %v428
    %430 = vmatmul.f32.gmra.mxu0 %v228
    %v431 = vpop.f32.mrf.mxu0
    %v432 = vadd.f32 %v170, %v431
    %433 = vmatmul.f32.gmra.mxu0 %v231
    %v434 = vpop.f32.mrf.mxu0
    %v435 = vadd.f32 %v175, %v434
    %436 = vmatmul.f32.gmra.mxu0 %v234
    %v437 = vpop.f32.mrf.mxu0
    %v438 = vadd.f32 %v180, %v437
    %439 = vmatmul.f32.gmra.mxu0 %v237
    %v440 = vpop.f32.mrf.mxu0
    %v441 = vadd.f32 %v185, %v440
    %442 = vdwg.mxu0
    %443 = vmatpush.msra.mxu0 0.0
    %444 = vmatpush.msra.mxu0 0.0
    %445 = vmatpush.msra.mxu0 0.0
    %446 = vmatpush.msra.mxu0 0.0
    %447 = vmatpush.msra.mxu0 0.0
    %448 = vmatpush.msra.mxu0 0.0
    %449 = vmatpush.msra.mxu0 0.0
    %450 = vmatpush.msra.mxu0 0.0
    %451 = vmatpush.msra.mxu0 %v67
    %452 = vmatpush.msra.mxu0 %v63
    %453 = vmatpush.msra.mxu0 %v59
    %454 = vmatpush.msra.mxu0 %v55
    %455 = vmatpush.msra.mxu0 %v51
    %456 = vmatpush.msra.mxu0 %v47
    %457 = vmatpush.msra.mxu0 %v43
    %458 = vmatpush.msra.mxu0 %v39
    %459 = vmatmul.f32.gmra.mxu0 %v189
    %v460 = vpop.f32.mrf.mxu0
    %v461 = vadd.f32 %v105, %v460
    %462 = vmatmul.f32.gmra.mxu0 %v192
    %v463 = vpop.f32.mrf.mxu0
    %v464 = vadd.f32 %v110, %v463
    %465 = vmatmul.f32.gmra.mxu0 %v195
    %v466 = vpop.f32.mrf.mxu0
    %v467 = vadd.f32 %v115, %v466
    %468 = vmatmul.f32.gmra.mxu0 %v198
    %v469 = vpop.f32.mrf.mxu0
    %v470 = vadd.f32 %v120, %v469
    %471 = vmatmul.f32.gmra.mxu0 %v201
    %v472 = vpop.f32.mrf.mxu0
    %v473 = vadd.f32 %v125, %v472
    %474 = vmatmul.f32.gmra.mxu0 %v204
    %v475 = vpop.f32.mrf.mxu0
    %v476 = vadd.f32 %v130, %v475
    %477 = vmatmul.f32.gmra.mxu0 %v207
    %v478 = vpop.f32.mrf.mxu0
    %v479 = vadd.f32 %v135, %v478
    %480 = vmatmul.f32.gmra.mxu0 %v210
    %v481 = vpop.f32.mrf.mxu0
    %v482 = vadd.f32 %v140, %v481
    %483 = vmatmul.f32.gmra.mxu0 %v213
    %v484 = vpop.f32.mrf.mxu0
    %v485 = vadd.f32 %v145, %v484
    %486 = vmatmul.f32.gmra.mxu0 %v216
    %v487 = vpop.f32.mrf.mxu0
    %v488 = vadd.f32 %v150, %v487
    %489 = vmatmul.f32.gmra.mxu0 %v219
    %v490 = vpop.f32.mrf.mxu0
    %v491 = vadd.f32 %v155, %v490
    %492 = vmatmul.f32.gmra.mxu0 %v222
    %v493 = vpop.f32.mrf.mxu0
    %v494 = vadd.f32 %v160, %v493
    %495 = vmatmul.f32.gmra.mxu0 %v225
    %v496 = vpop.f32.mrf.mxu0
    %v497 = vadd.f32 %v165, %v496
    %498 = vmatmul.f32.gmra.mxu0 %v228
    %v499 = vpop.f32.mrf.mxu0
    %v500 = vadd.f32 %v170, %v499
    %501 = vmatmul.f32.gmra.mxu0 %v231
    %v502 = vpop.f32.mrf.mxu0
    %v503 = vadd.f32 %v175, %v502
    %504 = vmatmul.f32.gmra.mxu0 %v234
    %v505 = vpop.f32.mrf.mxu0
    %v506 = vadd.f32 %v180, %v505
    %507 = vmatmul.f32.gmra.mxu0 %v237
    %v508 = vpop.f32.mrf.mxu0
    %v509 = vadd.f32 %v185, %v508
    %510 = vdwg.mxu0
    %vm511 = vcmp.gt.f32.partialorder %v257, 0.0
    %vm512 = vcmp.gt.f32.partialorder %v325, 0.0
    %vm513 = vcmp.gt.f32.partialorder %v393, 0.0
    %vm514 = vcmp.gt.f32.partialorder %v461, 0.0
    %vm515 = vcmp.gt.f32.partialorder %v260, 0.0
    %vm516 = vcmp.gt.f32.partialorder %v328, 0.0
    %vm517 = vcmp.gt.f32.partialorder %v396, 0.0
    %vm518 = vcmp.gt.f32.partialorder %v464, 0.0
    %vm519 = vcmp.gt.f32.partialorder %v263, 0.0
    %vm520 = vcmp.gt.f32.partialorder %v331, 0.0
    %vm521 = vcmp.gt.f32.partialorder %v399, 0.0
    %vm522 = vcmp.gt.f32.partialorder %v467, 0.0
    %vm523 = vcmp.gt.f32.partialorder %v266, 0.0
    %vm524 = vcmp.gt.f32.partialorder %v334, 0.0
    %vm525 = vcmp.gt.f32.partialorder %v402, 0.0
    %vm526 = vcmp.gt.f32.partialorder %v470, 0.0
    %vm527 = vcmp.gt.f32.partialorder %v269, 0.0
    %vm528 = vcmp.gt.f32.partialorder %v337, 0.0
    %vm529 = vcmp.gt.f32.partialorder %v405, 0.0
    %vm530 = vcmp.gt.f32.partialorder %v473, 0.0
    %vm531 = vcmp.gt.f32.partialorder %v272, 0.0
    %vm532 = vcmp.gt.f32.partialorder %v340, 0.0
    %vm533 = vcmp.gt.f32.partialorder %v408, 0.0
    %vm534 = vcmp.gt.f32.partialorder %v476, 0.0
    %vm535 = vcmp.gt.f32.partialorder %v275, 0.0
    %vm536 = vcmp.gt.f32.partialorder %v343, 0.0
    %vm537 = vcmp.gt.f32.partialorder %v411, 0.0
    %vm538 = vcmp.gt.f32.partialorder %v479, 0.0
    %vm539 = vcmp.gt.f32.partialorder %v278, 0.0
    %vm540 = vcmp.gt.f32.partialorder %v346, 0.0
    %vm541 = vcmp.gt.f32.partialorder %v414, 0.0
    %vm542 = vcmp.gt.f32.partialorder %v482, 0.0
    %vm543 = vcmp.gt.f32.partialorder %v281, 0.0
    %vm544 = vcmp.gt.f32.partialorder %v349, 0.0
    %vm545 = vcmp.gt.f32.partialorder %v417, 0.0
    %vm546 = vcmp.gt.f32.partialorder %v485, 0.0
    %vm547 = vcmp.gt.f32.partialorder %v284, 0.0
    %vm548 = vcmp.gt.f32.partialorder %v352, 0.0
    %vm549 = vcmp.gt.f32.partialorder %v420, 0.0
    %vm550 = vcmp.gt.f32.partialorder %v488, 0.0
    %vm551 = vcmp.gt.f32.partialorder %v287, 0.0
    %vm552 = vcmp.gt.f32.partialorder %v355, 0.0
    %vm553 = vcmp.gt.f32.partialorder %v423, 0.0
    %vm554 = vcmp.gt.f32.partialorder %v491, 0.0
    %vm555 = vcmp.gt.f32.partialorder %v290, 0.0
    %vm556 = vcmp.gt.f32.partialorder %v358, 0.0
    %vm557 = vcmp.gt.f32.partialorder %v426, 0.0
    %vm558 = vcmp.gt.f32.partialorder %v494, 0.0
    %vm559 = vcmp.gt.f32.partialorder %v293, 0.0
    %vm560 = vcmp.gt.f32.partialorder %v361, 0.0
    %vm561 = vcmp.gt.f32.partialorder %v429, 0.0
    %vm562 = vcmp.gt.f32.partialorder %v497, 0.0
    %vm563 = vcmp.gt.f32.partialorder %v296, 0.0
    %vm564 = vcmp.gt.f32.partialorder %v364, 0.0
    %vm565 = vcmp.gt.f32.partialorder %v432, 0.0
    %vm566 = vcmp.gt.f32.partialorder %v500, 0.0
    %vm567 = vcmp.gt.f32.partialorder %v299, 0.0
    %vm568 = vcmp.gt.f32.partialorder %v367, 0.0
    %vm569 = vcmp.gt.f32.partialorder %v435, 0.0
    %vm570 = vcmp.gt.f32.partialorder %v503, 0.0
    %vm571 = vcmp.gt.f32.partialorder %v302, 0.0
    %vm572 = vcmp.gt.f32.partialorder %v370, 0.0
    %vm573 = vcmp.gt.f32.partialorder %v438, 0.0
    %vm574 = vcmp.gt.f32.partialorder %v506, 0.0
    %vm575 = vcmp.gt.f32.partialorder %v305, 0.0
    %vm576 = vcmp.gt.f32.partialorder %v373, 0.0
    %vm577 = vcmp.gt.f32.partialorder %v441, 0.0
    %vm578 = vcmp.gt.f32.partialorder %v509, 0.0
    %v579 = vmul.f32 %v257, 0.01
    %v580 = vmul.f32 %v325, 0.01
    %v581 = vmul.f32 %v393, 0.01
    %v582 = vmul.f32 %v461, 0.01
    %v583 = vmul.f32 %v260, 0.01
    %v584 = vmul.f32 %v328, 0.01
    %v585 = vmul.f32 %v396, 0.01
    %v586 = vmul.f32 %v464, 0.01
    %v587 = vmul.f32 %v263, 0.01
    %v588 = vmul.f32 %v331, 0.01
    %v589 = vmul.f32 %v399, 0.01
    %v590 = vmul.f32 %v467, 0.01
    %v591 = vmul.f32 %v266, 0.01
    %v592 = vmul.f32 %v334, 0.01
    %v593 = vmul.f32 %v402, 0.01
    %v594 = vmul.f32 %v470, 0.01
    %v595 = vmul.f32 %v269, 0.01
    %v596 = vmul.f32 %v337, 0.01
    %v597 = vmul.f32 %v405, 0.01
    %v598 = vmul.f32 %v473, 0.01
    %v599 = vmul.f32 %v272, 0.01
    %v600 = vmul.f32 %v340, 0.01
    %v601 = vmul.f32 %v408, 0.01
    %v602 = vmul.f32 %v476, 0.01
    %v603 = vmul.f32 %v275, 0.01
    %v604 = vmul.f32 %v343, 0.01
    %v605 = vmul.f32 %v411, 0.01
    %v606 = vmul.f32 %v479, 0.01
    %v607 = vmul.f32 %v278, 0.01
    %v608 = vmul.f32 %v346, 0.01
    %v609 = vmul.f32 %v414, 0.01
    %v610 = vmul.f32 %v482, 0.01
    %v611 = vmul.f32 %v281, 0.01
    %v612 = vmul.f32 %v349, 0.01
    %v613 = vmul.f32 %v417, 0.01
    %v614 = vmul.f32 %v485, 0.01
    %v615 = vmul.f32 %v284, 0.01
    %v616 = vmul.f32 %v352, 0.01
    %v617 = vmul.f32 %v420, 0.01
    %v618 = vmul.f32 %v488, 0.01
    %v619 = vmul.f32 %v287, 0.01
    %v620 = vmul.f32 %v355, 0.01
    %v621 = vmul.f32 %v423, 0.01
    %v622 = vmul.f32 %v491, 0.01
    %v623 = vmul.f32 %v290, 0.01
    %v624 = vmul.f32 %v358, 0.01
    %v625 = vmul.f32 %v426, 0.01
    %v626 = vmul.f32 %v494, 0.01
    %v627 = vmul.f32 %v293, 0.01
    %v628 = vmul.f32 %v361, 0.01
    %v629 = vmul.f32 %v429, 0.01
    %v630 = vmul.f32 %v497, 0.01
    %v631 = vmul.f32 %v296, 0.01
    %v632 = vmul.f32 %v364, 0.01
    %v633 = vmul.f32 %v432, 0.01
    %v634 = vmul.f32 %v500, 0.01
    %v635 = vmul.f32 %v299, 0.01
    %v636 = vmul.f32 %v367, 0.01
    %v637 = vmul.f32 %v435, 0.01
    %v638 = vmul.f32 %v503, 0.01
    %v639 = vmul.f32 %v302, 0.01
    %v640 = vmul.f32 %v370, 0.01
    %v641 = vmul.f32 %v438, 0.01
    %v642 = vmul.f32 %v506, 0.01
    %v643 = vmul.f32 %v305, 0.01
    %v644 = vmul.f32 %v373, 0.01
    %v645 = vmul.f32 %v441, 0.01
    %v646 = vmul.f32 %v509, 0.01
    %v647 = vsel %vm511, %v257, %v579
    %v648 = vsel %vm512, %v325, %v580
    %v649 = vsel %vm513, %v393, %v581
    %v650 = vsel %vm514, %v461, %v582
    %v651 = vsel %vm515, %v260, %v583
    %v652 = vsel %vm516, %v328, %v584
    %v653 = vsel %vm517, %v396, %v585
    %v654 = vsel %vm518, %v464, %v586
    %v655 = vsel %vm519, %v263, %v587
    %v656 = vsel %vm520, %v331, %v588
    %v657 = vsel %vm521, %v399, %v589
    %v658 = vsel %vm522, %v467, %v590
    %v659 = vsel %vm523, %v266, %v591
    %v660 = vsel %vm524, %v334, %v592
    %v661 = vsel %vm525, %v402, %v593
    %v662 = vsel %vm526, %v470, %v594
    %v663 = vsel %vm527, %v269, %v595
    %v664 = vsel %vm528, %v337, %v596
    %v665 = vsel %vm529, %v405, %v597
    %v666 = vsel %vm530, %v473, %v598
    %v667 = vsel %vm531, %v272, %v599
    %v668 = vsel %vm532, %v340, %v600
    %v669 = vsel %vm533, %v408, %v601
    %v670 = vsel %vm534, %v476, %v602
    %v671 = vsel %vm535, %v275, %v603
    %v672 = vsel %vm536, %v343, %v604
    %v673 = vsel %vm537, %v411, %v605
    %v674 = vsel %vm538, %v479, %v606
    %v675 = vsel %vm539, %v278, %v607
    %v676 = vsel %vm540, %v346, %v608
    %v677 = vsel %vm541, %v414, %v609
    %v678 = vsel %vm542, %v482, %v610
    %v679 = vsel %vm543, %v281, %v611
    %v680 = vsel %vm544, %v349, %v612
    %v681 = vsel %vm545, %v417, %v613
    %v682 = vsel %vm546, %v485, %v614
    %v683 = vsel %vm547, %v284, %v615
    %v684 = vsel %vm548, %v352, %v616
    %v685 = vsel %vm549, %v420, %v617
    %v686 = vsel %vm550, %v488, %v618
    %v687 = vsel %vm551, %v287, %v619
    %v688 = vsel %vm552, %v355, %v620
    %v689 = vsel %vm553, %v423, %v621
    %v690 = vsel %vm554, %v491, %v622
    %v691 = vsel %vm555, %v290, %v623
    %v692 = vsel %vm556, %v358, %v624
    %v693 = vsel %vm557, %v426, %v625
    %v694 = vsel %vm558, %v494, %v626
    %v695 = vsel %vm559, %v293, %v627
    %v696 = vsel %vm560, %v361, %v628
    %v697 = vsel %vm561, %v429, %v629
    %v698 = vsel %vm562, %v497, %v630
    %v699 = vsel %vm563, %v296, %v631
    %v700 = vsel %vm564, %v364, %v632
    %v701 = vsel %vm565, %v432, %v633
    %v702 = vsel %vm566, %v500, %v634
    %v703 = vsel %vm567, %v299, %v635
    %v704 = vsel %vm568, %v367, %v636
    %v705 = vsel %vm569, %v435, %v637
    %v706 = vsel %vm570, %v503, %v638
    %v707 = vsel %vm571, %v302, %v639
    %v708 = vsel %vm572, %v370, %v640
    %v709 = vsel %vm573, %v438, %v641
    %v710 = vsel %vm574, %v506, %v642
    %v711 = vsel %vm575, %v305, %v643
    %v712 = vsel %vm576, %v373, %v644
    %v713 = vsel %vm577, %v441, %v645
    %v714 = vsel %vm578, %v509, %v646
    %v715 = vmul.f32 %v36, %v647
    %v716 = vmul.f32 %v37, %v648
    %v717 = vmul.f32 %v38, %v649
    %v718 = vmul.f32 %v39, %v650
    %v719 = vmul.f32 %v40, %v651
    %v720 = vmul.f32 %v41, %v652
    %v721 = vmul.f32 %v42, %v653
    %v722 = vmul.f32 %v43, %v654
    %v723 = vmul.f32 %v44, %v655
    %v724 = vmul.f32 %v45, %v656
    %v725 = vmul.f32 %v46, %v657
    %v726 = vmul.f32 %v47, %v658
    %v727 = vmul.f32 %v48, %v659
    %v728 = vmul.f32 %v49, %v660
    %v729 = vmul.f32 %v50, %v661
    %v730 = vmul.f32 %v51, %v662
    %v731 = vmul.f32 %v52, %v663
    %v732 = vmul.f32 %v53, %v664
    %v733 = vmul.f32 %v54, %v665
    %v734 = vmul.f32 %v55, %v666
    %v735 = vmul.f32 %v56, %v667
    %v736 = vmul.f32 %v57, %v668
    %v737 = vmul.f32 %v58, %v669
    %v738 = vmul.f32 %v59, %v670
    %v739 = vmul.f32 %v60, %v671
    %v740 = vmul.f32 %v61, %v672
    %v741 = vmul.f32 %v62, %v673
    %v742 = vmul.f32 %v63, %v674
    %v743 = vmul.f32 %v64, %v675
    %v744 = vmul.f32 %v65, %v676
    %v745 = vmul.f32 %v66, %v677
    %v746 = vmul.f32 %v67, %v678
    %v747 = vmul.f32 %v36, %v679
    %v748 = vmul.f32 %v37, %v680
    %v749 = vmul.f32 %v38, %v681
    %v750 = vmul.f32 %v39, %v682
    %v751 = vmul.f32 %v40, %v683
    %v752 = vmul.f32 %v41, %v684
    %v753 = vmul.f32 %v42, %v685
    %v754 = vmul.f32 %v43, %v686
    %v755 = vmul.f32 %v44, %v687
    %v756 = vmul.f32 %v45, %v688
    %v757 = vmul.f32 %v46, %v689
    %v758 = vmul.f32 %v47, %v690
    %v759 = vmul.f32 %v48, %v691
    %v760 = vmul.f32 %v49, %v692
    %v761 = vmul.f32 %v50, %v693
    %v762 = vmul.f32 %v51, %v694
    %v763 = vmul.f32 %v52, %v695
    %v764 = vmul.f32 %v53, %v696
    %v765 = vmul.f32 %v54, %v697
    %v766 = vmul.f32 %v55, %v698
    %v767 = vmul.f32 %v56, %v699
    %v768 = vmul.f32 %v57, %v700
    %v769 = vmul.f32 %v58, %v701
    %v770 = vmul.f32 %v59, %v702
    %v771 = vmul.f32 %v60, %v703
    %v772 = vmul.f32 %v61, %v704
    %v773 = vmul.f32 %v62, %v705
    %v774 = vmul.f32 %v63, %v706
    %v775 = vmul.f32 %v64, %v707
    %v776 = vmul.f32 %v65, %v708
    %v777 = vmul.f32 %v66, %v709
    %v778 = vmul.f32 %v67, %v710
    %v779 = vld [vmem:[%s3] sm:$0xff]
    %v780 = vld [vmem:[%s4] sm:$0xff]
    %782 = vset.pattern.permute.xlu0 0
    %783 = vperm.xlu0 %782, %v780
    %v784 = vpop.permute.xlu0 %783
    %786 = vmatpush.msra.mxu0 %v775
    %787 = vmatpush.msra.mxu0 %v771
    %788 = vmatpush.msra.mxu0 %v767
    %789 = vmatpush.msra.mxu0 %v763
    %790 = vmatpush.msra.mxu0 %v759
    %791 = vmatpush.msra.mxu0 %v755
    %792 = vmatpush.msra.mxu0 %v751
    %793 = vmatpush.msra.mxu0 %v747
    %794 = vmatpush.msra.mxu0 %v743
    %795 = vmatpush.msra.mxu0 %v739
    %796 = vmatpush.msra.mxu0 %v735
    %797 = vmatpush.msra.mxu0 %v731
    %798 = vmatpush.msra.mxu0 %v727
    %799 = vmatpush.msra.mxu0 %v723
    %800 = vmatpush.msra.mxu0 %v719
    %801 = vmatpush.msra.mxu0 %v715
    %802 = vmatmul.f32.gmra.mxu0 %v779
    %v803 = vpop.f32.mrf.mxu0
    %v804 = vadd.f32 %v784, %v803
    %805 = vdwg.mxu0
    %806 = vmatpush.msra.mxu0 %v776
    %807 = vmatpush.msra.mxu0 %v772
    %808 = vmatpush.msra.mxu0 %v768
    %809 = vmatpush.msra.mxu0 %v764
    %810 = vmatpush.msra.mxu0 %v760
    %811 = vmatpush.msra.mxu0 %v756
    %812 = vmatpush.msra.mxu0 %v752
    %813 = vmatpush.msra.mxu0 %v748
    %814 = vmatpush.msra.mxu0 %v744
    %815 = vmatpush.msra.mxu0 %v740
    %816 = vmatpush.msra.mxu0 %v736
    %817 = vmatpush.msra.mxu0 %v732
    %818 = vmatpush.msra.mxu0 %v728
    %819 = vmatpush.msra.mxu0 %v724
    %820 = vmatpush.msra.mxu0 %v720
    %821 = vmatpush.msra.mxu0 %v716
    %822 = vmatmul.f32.gmra.mxu0 %v779
    %v823 = vpop.f32.mrf.mxu0
    %v824 = vadd.f32 %v784, %v823
    %825 = vdwg.mxu0
    %826 = vmatpush.msra.mxu0 %v777
    %827 = vmatpush.msra.mxu0 %v773
    %828 = vmatpush.msra.mxu0 %v769
    %829 = vmatpush.msra.mxu0 %v765
    %830 = vmatpush.msra.mxu0 %v761
    %831 = vmatpush.msra.mxu0 %v757
    %832 = vmatpush.msra.mxu0 %v753
    %833 = vmatpush.msra.mxu0 %v749
    %834 = vmatpush.msra.mxu0 %v745
    %835 = vmatpush.msra.mxu0 %v741
    %836 = vmatpush.msra.mxu0 %v737
    %837 = vmatpush.msra.mxu0 %v733
    %838 = vmatpush.msra.mxu0 %v729
    %839 = vmatpush.msra.mxu0 %v725
    %840 = vmatpush.msra.mxu0 %v721
    %841 = vmatpush.msra.mxu0 %v717
    %842 = vmatmul.f32.gmra.mxu0 %v779
    %v843 = vpop.f32.mrf.mxu0
    %v844 = vadd.f32 %v784, %v843
    %845 = vdwg.mxu0
    %846 = vmatpush.msra.mxu0 %v778
    %847 = vmatpush.msra.mxu0 %v774
    %848 = vmatpush.msra.mxu0 %v770
    %849 = vmatpush.msra.mxu0 %v766
    %850 = vmatpush.msra.mxu0 %v762
    %851 = vmatpush.msra.mxu0 %v758
    %852 = vmatpush.msra.mxu0 %v754
    %853 = vmatpush.msra.mxu0 %v750
    %854 = vmatpush.msra.mxu0 %v746
    %855 = vmatpush.msra.mxu0 %v742
    %856 = vmatpush.msra.mxu0 %v738
    %857 = vmatpush.msra.mxu0 %v734
    %858 = vmatpush.msra.mxu0 %v730
    %859 = vmatpush.msra.mxu0 %v726
    %860 = vmatpush.msra.mxu0 %v722
    %861 = vmatpush.msra.mxu0 %v718
    %862 = vmatmul.f32.gmra.mxu0 %v779
    %v863 = vpop.f32.mrf.mxu0
    %v864 = vadd.f32 %v784, %v863
    %865 = vdwg.mxu0
    %vm866 = vcmp.gt.f32.partialorder %v804, 0.0
    %vm867 = vcmp.gt.f32.partialorder %v824, 0.0
    %vm868 = vcmp.gt.f32.partialorder %v844, 0.0
    %vm869 = vcmp.gt.f32.partialorder %v864, 0.0
    %v870 = vmul.f32 %v804, 0.01
    %v871 = vmul.f32 %v824, 0.01
    %v872 = vmul.f32 %v844, 0.01
    %v873 = vmul.f32 %v864, 0.01
    %v874 = vsel %vm866, %v804, %v870
    %v875 = vsel %vm867, %v824, %v871
    %v876 = vsel %vm868, %v844, %v872
    %v877 = vsel %vm869, %v864, %v873
    %s878 = sld [smem:[#allocation2]]
    %v879 = vstv %s878
    %v880 = vmul.f32 %v879, %v874
    %v881 = vmul.f32 %v879, %v875
    %v882 = vmul.f32 %v879, %v876
    %v883 = vmul.f32 %v879, %v877
    %s884 = sld [smem:[#allocation2 + $0x1]]
    %v885 = vstv %s884
    %v886 = vmul.f32 %v885, %v874
    %v887 = vmul.f32 %v885, %v875
    %v888 = vmul.f32 %v885, %v876
    %v889 = vmul.f32 %v885, %v877
    %v894 = vrot.slane %v886, 1
    %v895 = vrot.slane %v887, 1
    %v896 = vrot.slane %v888, 1
    %v897 = vrot.slane %v889, 1
    %v902 = vadd.f32 %v880, %v894
    %v903 = vadd.f32 %v881, %v895
    %v904 = vadd.f32 %v882, %v896
    %v905 = vadd.f32 %v883, %v897
    %s906 = sld [smem:[#allocation2 + $0x2]]
    %v907 = vstv %s906
    %v908 = vmul.f32 %v907, %v874
    %v909 = vmul.f32 %v907, %v875
    %v910 = vmul.f32 %v907, %v876
    %v911 = vmul.f32 %v907, %v877
    %v916 = vrot.slane %v908, 2
    %v917 = vrot.slane %v909, 2
    %v918 = vrot.slane %v910, 2
    %v919 = vrot.slane %v911, 2
    %v924 = vadd.f32 %v902, %v916
    %v925 = vadd.f32 %v903, %v917
    %v926 = vadd.f32 %v904, %v918
    %v927 = vadd.f32 %v905, %v919
    %s928 = sld [smem:[#allocation2 + $0x3]]
    %v929 = vstv %s928
    %v930 = vmul.f32 %v929, %v874
    %v931 = vmul.f32 %v929, %v875
    %v932 = vmul.f32 %v929, %v876
    %v933 = vmul.f32 %v929, %v877
    %v938 = vrot.slane %v930, 3
    %v939 = vrot.slane %v931, 3
    %v940 = vrot.slane %v932, 3
    %v941 = vrot.slane %v933, 3
    %v946 = vadd.f32 %v924, %v938
    %v947 = vadd.f32 %v925, %v939
    %v948 = vadd.f32 %v926, %v940
    %v949 = vadd.f32 %v927, %v941
    %s950 = sld [smem:[#allocation2 + $0x4]]
    %v951 = vstv %s950
    %v952 = vmul.f32 %v951, %v711
    %v953 = vmul.f32 %v951, %v712
    %v954 = vmul.f32 %v951, %v713
    %v955 = vmul.f32 %v951, %v714
    %v956 = vadd.f32 %v946, %v952
    %v957 = vadd.f32 %v947, %v953
    %v958 = vadd.f32 %v948, %v954
    %v959 = vadd.f32 %v949, %v955
    %s960 = sld [smem:[#allocation2 + $0x5]]
    %v961 = vstv %s960
    %v962 = vmul.f32 %v961, %v711
    %v963 = vmul.f32 %v961, %v712
    %v964 = vmul.f32 %v961, %v713
    %v965 = vmul.f32 %v961, %v714
    %v970 = vrot.slane %v962, 1
    %v971 = vrot.slane %v963, 1
    %v972 = vrot.slane %v964, 1
    %v973 = vrot.slane %v965, 1
    %v978 = vadd.f32 %v956, %v970
    %v979 = vadd.f32 %v957, %v971
    %v980 = vadd.f32 %v958, %v972
    %v981 = vadd.f32 %v959, %v973
    %s982 = sld [smem:[#allocation2 + $0x6]]
    %v983 = vstv %s982
    %v984 = vadd.f32 %v978, %v983
    %v985 = vadd.f32 %v979, %v983
    %v986 = vadd.f32 %v980, %v983
    %v987 = vadd.f32 %v981, %v983
    %v988 = vtanh.pop %v984
    %v989 = vtanh.pop %v985
    %v990 = vtanh.pop %v986
    %v991 = vtanh.pop %v987
    %v996 = vrot.slane %v989, 7
    %v997 = vrot.slane %v990, 6
    %v998 = vrot.slane %v991, 5
    %vm999 = vcmask 1040384
    %v1000 = vsel %vm999, %v988, %v996
    %vm1001 = vcmask 1042434
    %v1002 = vsel %vm1001, %v997, %v998
    %vm1003 = vcmask 1041408
    %v1004 = vsel %vm1003, %v1000, %v1002
    %v1006 = vlaneseq
    %vm1007 = vcmp.ge.s32.totalorder %v1006, 0
    %vm1008 = vcmp.lt.s32.totalorder %v1006, 512
    %vm1009 = vmand %vm1007, %vm1008
    %1010 = vst.msk [vmem:[%s6] sm:$0xf] %vm1009, %v1004
    // Predicated region
    $region30: #{revnet2_forward.1} parent=1 // pred_check
      _
    $region31: #{revnet2_forward.1} parent=1 // pred_check_branch
      %1012 = sbr.rel (0) target = $region33
    $region32: #{revnet2_forward.1} parent=1 // pred_region
      _
    $region33: #{revnet2_forward.1} parent=1 // pred_fallthru
      _
    // Predicated region
    $region34: #{revnet2_forward.1} parent=1 // pred_check
      _
    $region35: #{revnet2_forward.1} parent=1 // pred_check_branch
      %1014 = sbr.rel (0) target = $region37
    $region36: #{revnet2_forward.1} parent=1 // pred_region
      _
    $region37: #{revnet2_forward.1} parent=1 // pred_fallthru
      _
    %1015 = vsyncpa [#allocation3], 1

</llo_original>
